<compile_context>
chip_gen: v5e
topology: v5e:2x2
jax: 0.10.0
libtpu: 0.0.40
codegen_flags: <defaults>
</compile_context>

<pallas_src>
import functools

import jax
import jax.numpy as jnp
import numpy as np
from jax import lax
from jax.experimental import pallas as pl
from jax.experimental.pallas import tpu as pltpu


def _unfold_kernel(x_ref, o_ref, *, C, p, rows, n_w, per_channel_store, unroll):
    # x_ref: (1, C, rows, p, n_w, p) window of the 6-D input view.
    # o_ref: (1, rows*n_w, D) window of the (B, L, D) output, D = C*p*p.
    pp = p * p

    def emit_row(oh):
        row_off = oh * n_w
        if n_w % 8 == 0 and not isinstance(oh, int):
            row_off = pl.multiple_of(row_off, 8)     # 8-aligned sublane offset
        chunks = []
        for c in range(C):                           # channel-major feature order
            pieces = [x_ref[0, c, oh, ki, :, :] for ki in range(p)]   # (n_w, p)
            chunk = jnp.concatenate(pieces, axis=-1)                  # (n_w, p*p)
            if per_channel_store:
                # Lane-aligned chunk store: bounds live vregs to ~p+2.
                o_ref[0, pl.ds(row_off, n_w), c * pp:(c + 1) * pp] = chunk
            else:
                chunks.append(chunk)
        if not per_channel_store:
            # Small D: one fused band store per patch row.
            o_ref[0, pl.ds(row_off, n_w), :] = jnp.concatenate(chunks, axis=-1)

    if unroll >= rows:
        for oh in range(rows):          # fully unrolled tiny bodies
            emit_row(oh)
    else:
        def body(oh, carry):
            emit_row(oh)
            return carry
        lax.fori_loop(0, rows, body, 0, unroll=unroll)


def _vmem_params():
    # Chip-aware VMEM limit/budget: ~64 MiB limit on 128 MiB chips (v5e/v6e),
    # ~32 MiB on 64 MiB chips (v7x); budget = 0.75 * limit for double-buffered
    # blocks plus Mosaic-internal scratch headroom.
    try:
        cap = int(pltpu.get_tpu_info().vmem_capacity_bytes)
    except Exception:
        cap = 64 * 1024 * 1024          # conservative fallback (v7x physical)
    limit = cap // 2
    budget = (limit * 3) // 4
    return cap, limit, budget


def _num_tensorcores():
    # 2 TensorCores per JAX device on v4/v5p (megacore) and v7x; 1 elsewhere.
    try:
        kind = jax.devices()[0].device_kind.lower()
    except Exception:
        return 1
    return 2 if any(tag in kind for tag in ("v4", "v5p", "7")) else 1


def _pick_row_tile(n_h, n_w, C, p, itemsize, batch, budget, multicore):
    D = C * p * p

    def pad(v, m):
        return -(-v // m) * m

    def step_bytes(t):
        # Double-buffered in+out block footprint, including (8,128) tile
        # padding of the minor block dims (the DMA-fold layout pads lanes to
        # 128 per (n_w, p) slab, which is why this is accounted for here).
        in_b = C * t * p * pad(n_w, 8) * pad(p, 128) * itemsize
        out_b = pad(t * n_w, 8) * pad(D, 128) * itemsize
        return 2 * (in_b + out_b)

    # T must divide n_h; output block sublane extent T*n_w must be a multiple
    # of 8 or cover the full L axis (Pallas (8,128) block rule).
    valid = [t for t in range(1, n_h + 1)
             if n_h % t == 0 and ((t * n_w) % 8 == 0 or t == n_h)]
    fitting = [t for t in valid if step_bytes(t) <= budget] or [min(valid)]
    if multicore and batch == 1:
        # Only split a batch-1 call when the chip has 2 TensorCores.
        multi = [t for t in fitting if t < n_h]
        if multi:
            t = max(multi)
            return t, step_bytes(t)
    t = max(fitting)
    return t, step_bytes(t)


def patch_embed(x, patch_dim=3):
    # Input: NCHW (B, C, H, W); output (B, L, D) matching
    # F.unfold(x, p, stride=p).transpose(1, 2).
    B, C, H, W = x.shape
    p = patch_dim
    if p <= 0 or H < p or W < p:
        raise ValueError(f"patch_dim={p} incompatible with spatial dims {(H, W)}")
    n_h = (H - p) // p + 1
    n_w = (W - p) // p + 1
    L, D = n_h * n_w, C * p * p
    Hc, Wc = n_h * p, n_w * p

    # Crop only when H/W are not divisible by p (unfold's floor behavior).  In
    # the divisible case the reshape below is a metadata-only view, so the
    # BlockSpec DMAs straight from the original HBM buffer (no copy).
    # TODO(synk): the non-divisible case still materializes one crop copy; see
    # header note on why the full-W / in-kernel-fold alternative is not used.
    if (Hc, Wc) != (H, W):
        x = x[:, :, :Hc, :Wc]
    x6 = x.reshape(B, C, n_h, p, n_w, p)

    cap, limit, budget = _vmem_params()
    multicore = _num_tensorcores() > 1
    T, need = _pick_row_tile(n_h, n_w, C, p, x.dtype.itemsize, B, budget, multicore)
    if need > (cap * 9) // 10:
        raise ValueError(
            f"Patch_Embed: smallest legal row tile needs ~{need / 2**20:.1f} MiB of "
            f"VMEM, exceeding this chip's ~{cap / 2**20:.0f} MiB capacity; reduce "
            "the image size or patch_dim.")
    vmem_limit = int(min(max(limit, (need * 5) // 4), (cap * 9) // 10))
    n_row_tiles = n_h // T

    pieces_per_row = C * p
    # Per-channel chunk stores when the chunk width p*p is lane-aligned
    # (unmasked 128-lane-multiple stores) or when a fused band would keep too
    # many pieces live; otherwise keep the fused full-band store.
    per_channel_store = (C > 1) and ((p * p) % 128 == 0 or pieces_per_row > 64)
    if T * pieces_per_row <= 128:
        unroll = T                       # tiny body: fully unroll
    elif pieces_per_row <= 32:
        unroll = 4
    elif pieces_per_row <= 128:
        unroll = 2
    else:
        unroll = 1

    kernel = functools.partial(
        _unfold_kernel, C=C, p=p, rows=T, n_w=n_w,
        per_channel_store=per_channel_store, unroll=unroll)

    return pl.pallas_call(
        kernel,
        out_shape=jax.ShapeDtypeStruct((B, L, D), x.dtype),
        grid=(B, n_row_tiles),
        in_specs=[
            pl.BlockSpec((1, C, T, p, n_w, p),
                         lambda b, t: (b, 0, t, 0, 0, 0)),
        ],
        out_specs=pl.BlockSpec((1, T * n_w, D), lambda b, t: (b, t, 0)),
        compiler_params=pltpu.CompilerParams(
            dimension_semantics=("parallel", "parallel"),
            vmem_limit_bytes=vmem_limit),
    )(x6)


def patch_embed_ref(x, patch_dim=3):
    # Pure-JAX reference (same semantics as F.unfold(...).transpose(1, 2)).
    B, C, H, W = x.shape
    p = patch_dim
    n_h = (H - p) // p + 1
    n_w = (W - p) // p + 1
    x6 = x[:, :, :n_h * p, :n_w * p].reshape(B, C, n_h, p, n_w, p)
    return jnp.transpose(x6, (0, 2, 4, 1, 3, 5)).reshape(B, n_h * n_w, C * p * p)


if __name__ == "__main__":
    key = jax.random.PRNGKey(0)
    k0, k1 = jax.random.split(key)

    # Primary check: B=2, C=4, H=W=16, patch_dim=3 (16 not divisible by 3
    # exercises unfold's floor/crop behavior).
    x = jax.random.normal(k0, (2, 4, 16, 16), dtype=jnp.float32)
    out = jax.block_until_ready(patch_embed(x, patch_dim=3))
    ref = patch_embed_ref(x, patch_dim=3)
    np.testing.assert_allclose(np.asarray(out), np.asarray(ref), rtol=0, atol=0)

    # Secondary check: divisible case, batch=1 (zero-copy wrapper view; row
    # tiling path also exercised on 2-TensorCore chips).
    x2 = jax.random.normal(k1, (1, 3, 8, 8), dtype=jnp.float32)
    out2 = jax.block_until_ready(patch_embed(x2, patch_dim=2))
    ref2 = patch_embed_ref(x2, patch_dim=2)
    np.testing.assert_allclose(np.asarray(out2), np.asarray(ref2), rtol=0, atol=0)

    print("KERNEL_OK")
</pallas_src>

<mosaic_0001>
module attributes {stable_mosaic.version = 11 : i64} {
  func.func @_unfold_kernel(%arg0: i32, %arg1: i32, %arg2: memref<1x4x5x3x5x3xf32, #tpu.memory_space<vmem>>, %arg3: memref<1x25x36xf32, #tpu.memory_space<vmem>>) attributes {dimension_semantics = [#tpu.dimension_semantics<parallel>, #tpu.dimension_semantics<parallel>], iteration_bounds = array<i64: 2, 1>, scalar_prefetch = 0 : i64, scratch_operands = 0 : i64, tpu.core_type = #tpu.core_type<tc>, window_params = [{transform_indices = @transform_0, window_bounds = array<i64: 1, 4, 5, 3, 5, 3>}, {transform_indices = @transform_1, window_bounds = array<i64: 1, 25, 36>}]} {
    %c0 = arith.constant 0 : index
    %c0_0 = arith.constant 0 : index
    %c0_1 = arith.constant 0 : index
    %c0_2 = arith.constant 0 : index
    %c0_3 = arith.constant 0 : index
    %c0_4 = arith.constant 0 : index
    %0 = vector.load %arg2[%c0, %c0_0, %c0_1, %c0_2, %c0_3, %c0_4] : memref<1x4x5x3x5x3xf32, #tpu.memory_space<vmem>>, vector<1x1x1x1x5x3xf32>
    %1 = vector.shape_cast %0 : vector<1x1x1x1x5x3xf32> to vector<5x3xf32>
    %c0_5 = arith.constant 0 : index
    %c0_6 = arith.constant 0 : index
    %c0_7 = arith.constant 0 : index
    %c1 = arith.constant 1 : index
    %c0_8 = arith.constant 0 : index
    %c0_9 = arith.constant 0 : index
    %2 = vector.load %arg2[%c0_5, %c0_6, %c0_7, %c1, %c0_8, %c0_9] : memref<1x4x5x3x5x3xf32, #tpu.memory_space<vmem>>, vector<1x1x1x1x5x3xf32>
    %3 = vector.shape_cast %2 : vector<1x1x1x1x5x3xf32> to vector<5x3xf32>
    %c0_10 = arith.constant 0 : index
    %c0_11 = arith.constant 0 : index
    %c0_12 = arith.constant 0 : index
    %c2 = arith.constant 2 : index
    %c0_13 = arith.constant 0 : index
    %c0_14 = arith.constant 0 : index
    %4 = vector.load %arg2[%c0_10, %c0_11, %c0_12, %c2, %c0_13, %c0_14] : memref<1x4x5x3x5x3xf32, #tpu.memory_space<vmem>>, vector<1x1x1x1x5x3xf32>
    %5 = vector.shape_cast %4 : vector<1x1x1x1x5x3xf32> to vector<5x3xf32>
    %6 = tpu.concatenate %1, %3, %5 in 1 : vector<5x3xf32>, vector<5x3xf32>, vector<5x3xf32> -> vector<5x9xf32>
    %c0_15 = arith.constant 0 : index
    %c1_16 = arith.constant 1 : index
    %c0_17 = arith.constant 0 : index
    %c0_18 = arith.constant 0 : index
    %c0_19 = arith.constant 0 : index
    %c0_20 = arith.constant 0 : index
    %7 = vector.load %arg2[%c0_15, %c1_16, %c0_17, %c0_18, %c0_19, %c0_20] : memref<1x4x5x3x5x3xf32, #tpu.memory_space<vmem>>, vector<1x1x1x1x5x3xf32>
    %8 = vector.shape_cast %7 : vector<1x1x1x1x5x3xf32> to vector<5x3xf32>
    %c0_21 = arith.constant 0 : index
    %c1_22 = arith.constant 1 : index
    %c0_23 = arith.constant 0 : index
    %c1_24 = arith.constant 1 : index
    %c0_25 = arith.constant 0 : index
    %c0_26 = arith.constant 0 : index
    %9 = vector.load %arg2[%c0_21, %c1_22, %c0_23, %c1_24, %c0_25, %c0_26] : memref<1x4x5x3x5x3xf32, #tpu.memory_space<vmem>>, vector<1x1x1x1x5x3xf32>
    %10 = vector.shape_cast %9 : vector<1x1x1x1x5x3xf32> to vector<5x3xf32>
    %c0_27 = arith.constant 0 : index
    %c1_28 = arith.constant 1 : index
    %c0_29 = arith.constant 0 : index
    %c2_30 = arith.constant 2 : index
    %c0_31 = arith.constant 0 : index
    %c0_32 = arith.constant 0 : index
    %11 = vector.load %arg2[%c0_27, %c1_28, %c0_29, %c2_30, %c0_31, %c0_32] : memref<1x4x5x3x5x3xf32, #tpu.memory_space<vmem>>, vector<1x1x1x1x5x3xf32>
    %12 = vector.shape_cast %11 : vector<1x1x1x1x5x3xf32> to vector<5x3xf32>
    %13 = tpu.concatenate %8, %10, %12 in 1 : vector<5x3xf32>, vector<5x3xf32>, vector<5x3xf32> -> vector<5x9xf32>
    %c0_33 = arith.constant 0 : index
    %c2_34 = arith.constant 2 : index
    %c0_35 = arith.constant 0 : index
    %c0_36 = arith.constant 0 : index
    %c0_37 = arith.constant 0 : index
    %c0_38 = arith.constant 0 : index
    %14 = vector.load %arg2[%c0_33, %c2_34, %c0_35, %c0_36, %c0_37, %c0_38] : memref<1x4x5x3x5x3xf32, #tpu.memory_space<vmem>>, vector<1x1x1x1x5x3xf32>
    %15 = vector.shape_cast %14 : vector<1x1x1x1x5x3xf32> to vector<5x3xf32>
    %c0_39 = arith.constant 0 : index
    %c2_40 = arith.constant 2 : index
    %c0_41 = arith.constant 0 : index
    %c1_42 = arith.constant 1 : index
    %c0_43 = arith.constant 0 : index
    %c0_44 = arith.constant 0 : index
    %16 = vector.load %arg2[%c0_39, %c2_40, %c0_41, %c1_42, %c0_43, %c0_44] : memref<1x4x5x3x5x3xf32, #tpu.memory_space<vmem>>, vector<1x1x1x1x5x3xf32>
    %17 = vector.shape_cast %16 : vector<1x1x1x1x5x3xf32> to vector<5x3xf32>
    %c0_45 = arith.constant 0 : index
    %c2_46 = arith.constant 2 : index
    %c0_47 = arith.constant 0 : index
    %c2_48 = arith.constant 2 : index
    %c0_49 = arith.constant 0 : index
    %c0_50 = arith.constant 0 : index
    %18 = vector.load %arg2[%c0_45, %c2_46, %c0_47, %c2_48, %c0_49, %c0_50] : memref<1x4x5x3x5x3xf32, #tpu.memory_space<vmem>>, vector<1x1x1x1x5x3xf32>
    %19 = vector.shape_cast %18 : vector<1x1x1x1x5x3xf32> to vector<5x3xf32>
    %20 = tpu.concatenate %15, %17, %19 in 1 : vector<5x3xf32>, vector<5x3xf32>, vector<5x3xf32> -> vector<5x9xf32>
    %c0_51 = arith.constant 0 : index
    %c3 = arith.constant 3 : index
    %c0_52 = arith.constant 0 : index
    %c0_53 = arith.constant 0 : index
    %c0_54 = arith.constant 0 : index
    %c0_55 = arith.constant 0 : index
    %21 = vector.load %arg2[%c0_51, %c3, %c0_52, %c0_53, %c0_54, %c0_55] : memref<1x4x5x3x5x3xf32, #tpu.memory_space<vmem>>, vector<1x1x1x1x5x3xf32>
    %22 = vector.shape_cast %21 : vector<1x1x1x1x5x3xf32> to vector<5x3xf32>
    %c0_56 = arith.constant 0 : index
    %c3_57 = arith.constant 3 : index
    %c0_58 = arith.constant 0 : index
    %c1_59 = arith.constant 1 : index
    %c0_60 = arith.constant 0 : index
    %c0_61 = arith.constant 0 : index
    %23 = vector.load %arg2[%c0_56, %c3_57, %c0_58, %c1_59, %c0_60, %c0_61] : memref<1x4x5x3x5x3xf32, #tpu.memory_space<vmem>>, vector<1x1x1x1x5x3xf32>
    %24 = vector.shape_cast %23 : vector<1x1x1x1x5x3xf32> to vector<5x3xf32>
    %c0_62 = arith.constant 0 : index
    %c3_63 = arith.constant 3 : index
    %c0_64 = arith.constant 0 : index
    %c2_65 = arith.constant 2 : index
    %c0_66 = arith.constant 0 : index
    %c0_67 = arith.constant 0 : index
    %25 = vector.load %arg2[%c0_62, %c3_63, %c0_64, %c2_65, %c0_66, %c0_67] : memref<1x4x5x3x5x3xf32, #tpu.memory_space<vmem>>, vector<1x1x1x1x5x3xf32>
    %26 = vector.shape_cast %25 : vector<1x1x1x1x5x3xf32> to vector<5x3xf32>
    %27 = tpu.concatenate %22, %24, %26 in 1 : vector<5x3xf32>, vector<5x3xf32>, vector<5x3xf32> -> vector<5x9xf32>
    %28 = tpu.concatenate %6, %13, %20, %27 in 1 : vector<5x9xf32>, vector<5x9xf32>, vector<5x9xf32>, vector<5x9xf32> -> vector<5x36xf32>
    %c0_68 = arith.constant 0 : index
    %c0_69 = arith.constant 0 : index
    %c0_70 = arith.constant 0 : index
    %29 = vector.load %arg3[%c0_68, %c0_69, %c0_70] : memref<1x25x36xf32, #tpu.memory_space<vmem>>, vector<1x5x36xf32>
    %30 = vector.shape_cast %29 : vector<1x5x36xf32> to vector<5x36xf32>
    %31 = vector.shape_cast %28 : vector<5x36xf32> to vector<1x5x36xf32>
    tpu.vector_store %arg3[%c0_68, %c0_69, %c0_70], %31 {strides = array<i32>} : memref<1x25x36xf32, #tpu.memory_space<vmem>>, vector<1x5x36xf32>,
    %c0_71 = arith.constant 0 : index
    %c0_72 = arith.constant 0 : index
    %c1_73 = arith.constant 1 : index
    %c0_74 = arith.constant 0 : index
    %c0_75 = arith.constant 0 : index
    %c0_76 = arith.constant 0 : index
    %32 = vector.load %arg2[%c0_71, %c0_72, %c1_73, %c0_74, %c0_75, %c0_76] : memref<1x4x5x3x5x3xf32, #tpu.memory_space<vmem>>, vector<1x1x1x1x5x3xf32>
    %33 = vector.shape_cast %32 : vector<1x1x1x1x5x3xf32> to vector<5x3xf32>
    %c0_77 = arith.constant 0 : index
    %c0_78 = arith.constant 0 : index
    %c1_79 = arith.constant 1 : index
    %c1_80 = arith.constant 1 : index
    %c0_81 = arith.constant 0 : index
    %c0_82 = arith.constant 0 : index
    %34 = vector.load %arg2[%c0_77, %c0_78, %c1_79, %c1_80, %c0_81, %c0_82] : memref<1x4x5x3x5x3xf32, #tpu.memory_space<vmem>>, vector<1x1x1x1x5x3xf32>
    %35 = vector.shape_cast %34 : vector<1x1x1x1x5x3xf32> to vector<5x3xf32>
    %c0_83 = arith.constant 0 : index
    %c0_84 = arith.constant 0 : index
    %c1_85 = arith.constant 1 : index
    %c2_86 = arith.constant 2 : index
    %c0_87 = arith.constant 0 : index
    %c0_88 = arith.constant 0 : index
    %36 = vector.load %arg2[%c0_83, %c0_84, %c1_85, %c2_86, %c0_87, %c0_88] : memref<1x4x5x3x5x3xf32, #tpu.memory_space<vmem>>, vector<1x1x1x1x5x3xf32>
    %37 = vector.shape_cast %36 : vector<1x1x1x1x5x3xf32> to vector<5x3xf32>
    %38 = tpu.concatenate %33, %35, %37 in 1 : vector<5x3xf32>, vector<5x3xf32>, vector<5x3xf32> -> vector<5x9xf32>
    %c0_89 = arith.constant 0 : index
    %c1_90 = arith.constant 1 : index
    %c1_91 = arith.constant 1 : index
    %c0_92 = arith.constant 0 : index
    %c0_93 = arith.constant 0 : index
    %c0_94 = arith.constant 0 : index
    %39 = vector.load %arg2[%c0_89, %c1_90, %c1_91, %c0_92, %c0_93, %c0_94] : memref<1x4x5x3x5x3xf32, #tpu.memory_space<vmem>>, vector<1x1x1x1x5x3xf32>
    %40 = vector.shape_cast %39 : vector<1x1x1x1x5x3xf32> to vector<5x3xf32>
    %c0_95 = arith.constant 0 : index
    %c1_96 = arith.constant 1 : index
    %c1_97 = arith.constant 1 : index
    %c1_98 = arith.constant 1 : index
    %c0_99 = arith.constant 0 : index
    %c0_100 = arith.constant 0 : index
    %41 = vector.load %arg2[%c0_95, %c1_96, %c1_97, %c1_98, %c0_99, %c0_100] : memref<1x4x5x3x5x3xf32, #tpu.memory_space<vmem>>, vector<1x1x1x1x5x3xf32>
    %42 = vector.shape_cast %41 : vector<1x1x1x1x5x3xf32> to vector<5x3xf32>
    %c0_101 = arith.constant 0 : index
    %c1_102 = arith.constant 1 : index
    %c1_103 = arith.constant 1 : index
    %c2_104 = arith.constant 2 : index
    %c0_105 = arith.constant 0 : index
    %c0_106 = arith.constant 0 : index
    %43 = vector.load %arg2[%c0_101, %c1_102, %c1_103, %c2_104, %c0_105, %c0_106] : memref<1x4x5x3x5x3xf32, #tpu.memory_space<vmem>>, vector<1x1x1x1x5x3xf32>
    %44 = vector.shape_cast %43 : vector<1x1x1x1x5x3xf32> to vector<5x3xf32>
    %45 = tpu.concatenate %40, %42, %44 in 1 : vector<5x3xf32>, vector<5x3xf32>, vector<5x3xf32> -> vector<5x9xf32>
    %c0_107 = arith.constant 0 : index
    %c2_108 = arith.constant 2 : index
    %c1_109 = arith.constant 1 : index
    %c0_110 = arith.constant 0 : index
    %c0_111 = arith.constant 0 : index
    %c0_112 = arith.constant 0 : index
    %46 = vector.load %arg2[%c0_107, %c2_108, %c1_109, %c0_110, %c0_111, %c0_112] : memref<1x4x5x3x5x3xf32, #tpu.memory_space<vmem>>, vector<1x1x1x1x5x3xf32>
    %47 = vector.shape_cast %46 : vector<1x1x1x1x5x3xf32> to vector<5x3xf32>
    %c0_113 = arith.constant 0 : index
    %c2_114 = arith.constant 2 : index
    %c1_115 = arith.constant 1 : index
    %c1_116 = arith.constant 1 : index
    %c0_117 = arith.constant 0 : index
    %c0_118 = arith.constant 0 : index
    %48 = vector.load %arg2[%c0_113, %c2_114, %c1_115, %c1_116, %c0_117, %c0_118] : memref<1x4x5x3x5x3xf32, #tpu.memory_space<vmem>>, vector<1x1x1x1x5x3xf32>
    %49 = vector.shape_cast %48 : vector<1x1x1x1x5x3xf32> to vector<5x3xf32>
    %c0_119 = arith.constant 0 : index
    %c2_120 = arith.constant 2 : index
    %c1_121 = arith.constant 1 : index
    %c2_122 = arith.constant 2 : index
    %c0_123 = arith.constant 0 : index
    %c0_124 = arith.constant 0 : index
    %50 = vector.load %arg2[%c0_119, %c2_120, %c1_121, %c2_122, %c0_123, %c0_124] : memref<1x4x5x3x5x3xf32, #tpu.memory_space<vmem>>, vector<1x1x1x1x5x3xf32>
    %51 = vector.shape_cast %50 : vector<1x1x1x1x5x3xf32> to vector<5x3xf32>
    %52 = tpu.concatenate %47, %49, %51 in 1 : vector<5x3xf32>, vector<5x3xf32>, vector<5x3xf32> -> vector<5x9xf32>
    %c0_125 = arith.constant 0 : index
    %c3_126 = arith.constant 3 : index
    %c1_127 = arith.constant 1 : index
    %c0_128 = arith.constant 0 : index
    %c0_129 = arith.constant 0 : index
    %c0_130 = arith.constant 0 : index
    %53 = vector.load %arg2[%c0_125, %c3_126, %c1_127, %c0_128, %c0_129, %c0_130] : memref<1x4x5x3x5x3xf32, #tpu.memory_space<vmem>>, vector<1x1x1x1x5x3xf32>
    %54 = vector.shape_cast %53 : vector<1x1x1x1x5x3xf32> to vector<5x3xf32>
    %c0_131 = arith.constant 0 : index
    %c3_132 = arith.constant 3 : index
    %c1_133 = arith.constant 1 : index
    %c1_134 = arith.constant 1 : index
    %c0_135 = arith.constant 0 : index
    %c0_136 = arith.constant 0 : index
    %55 = vector.load %arg2[%c0_131, %c3_132, %c1_133, %c1_134, %c0_135, %c0_136] : memref<1x4x5x3x5x3xf32, #tpu.memory_space<vmem>>, vector<1x1x1x1x5x3xf32>
    %56 = vector.shape_cast %55 : vector<1x1x1x1x5x3xf32> to vector<5x3xf32>
    %c0_137 = arith.constant 0 : index
    %c3_138 = arith.constant 3 : index
    %c1_139 = arith.constant 1 : index
    %c2_140 = arith.constant 2 : index
    %c0_141 = arith.constant 0 : index
    %c0_142 = arith.constant 0 : index
    %57 = vector.load %arg2[%c0_137, %c3_138, %c1_139, %c2_140, %c0_141, %c0_142] : memref<1x4x5x3x5x3xf32, #tpu.memory_space<vmem>>, vector<1x1x1x1x5x3xf32>
    %58 = vector.shape_cast %57 : vector<1x1x1x1x5x3xf32> to vector<5x3xf32>
    %59 = tpu.concatenate %54, %56, %58 in 1 : vector<5x3xf32>, vector<5x3xf32>, vector<5x3xf32> -> vector<5x9xf32>
    %60 = tpu.concatenate %38, %45, %52, %59 in 1 : vector<5x9xf32>, vector<5x9xf32>, vector<5x9xf32>, vector<5x9xf32> -> vector<5x36xf32>
    %c0_143 = arith.constant 0 : index
    %c5 = arith.constant 5 : index
    %c0_144 = arith.constant 0 : index
    %61 = vector.load %arg3[%c0_143, %c5, %c0_144] : memref<1x25x36xf32, #tpu.memory_space<vmem>>, vector<1x5x36xf32>
    %62 = vector.shape_cast %61 : vector<1x5x36xf32> to vector<5x36xf32>
    %63 = vector.shape_cast %60 : vector<5x36xf32> to vector<1x5x36xf32>
    tpu.vector_store %arg3[%c0_143, %c5, %c0_144], %63 {strides = array<i32>} : memref<1x25x36xf32, #tpu.memory_space<vmem>>, vector<1x5x36xf32>,
    %c0_145 = arith.constant 0 : index
    %c0_146 = arith.constant 0 : index
    %c2_147 = arith.constant 2 : index
    %c0_148 = arith.constant 0 : index
    %c0_149 = arith.constant 0 : index
    %c0_150 = arith.constant 0 : index
    %64 = vector.load %arg2[%c0_145, %c0_146, %c2_147, %c0_148, %c0_149, %c0_150] : memref<1x4x5x3x5x3xf32, #tpu.memory_space<vmem>>, vector<1x1x1x1x5x3xf32>
    %65 = vector.shape_cast %64 : vector<1x1x1x1x5x3xf32> to vector<5x3xf32>
    %c0_151 = arith.constant 0 : index
    %c0_152 = arith.constant 0 : index
    %c2_153 = arith.constant 2 : index
    %c1_154 = arith.constant 1 : index
    %c0_155 = arith.constant 0 : index
    %c0_156 = arith.constant 0 : index
    %66 = vector.load %arg2[%c0_151, %c0_152, %c2_153, %c1_154, %c0_155, %c0_156] : memref<1x4x5x3x5x3xf32, #tpu.memory_space<vmem>>, vector<1x1x1x1x5x3xf32>
    %67 = vector.shape_cast %66 : vector<1x1x1x1x5x3xf32> to vector<5x3xf32>
    %c0_157 = arith.constant 0 : index
    %c0_158 = arith.constant 0 : index
    %c2_159 = arith.constant 2 : index
    %c2_160 = arith.constant 2 : index
    %c0_161 = arith.constant 0 : index
    %c0_162 = arith.constant 0 : index
    %68 = vector.load %arg2[%c0_157, %c0_158, %c2_159, %c2_160, %c0_161, %c0_162] : memref<1x4x5x3x5x3xf32, #tpu.memory_space<vmem>>, vector<1x1x1x1x5x3xf32>
    %69 = vector.shape_cast %68 : vector<1x1x1x1x5x3xf32> to vector<5x3xf32>
    %70 = tpu.concatenate %65, %67, %69 in 1 : vector<5x3xf32>, vector<5x3xf32>, vector<5x3xf32> -> vector<5x9xf32>
    %c0_163 = arith.constant 0 : index
    %c1_164 = arith.constant 1 : index
    %c2_165 = arith.constant 2 : index
    %c0_166 = arith.constant 0 : index
    %c0_167 = arith.constant 0 : index
    %c0_168 = arith.constant 0 : index
    %71 = vector.load %arg2[%c0_163, %c1_164, %c2_165, %c0_166, %c0_167, %c0_168] : memref<1x4x5x3x5x3xf32, #tpu.memory_space<vmem>>, vector<1x1x1x1x5x3xf32>
    %72 = vector.shape_cast %71 : vector<1x1x1x1x5x3xf32> to vector<5x3xf32>
    %c0_169 = arith.constant 0 : index
    %c1_170 = arith.constant 1 : index
    %c2_171 = arith.constant 2 : index
    %c1_172 = arith.constant 1 : index
    %c0_173 = arith.constant 0 : index
    %c0_174 = arith.constant 0 : index
    %73 = vector.load %arg2[%c0_169, %c1_170, %c2_171, %c1_172, %c0_173, %c0_174] : memref<1x4x5x3x5x3xf32, #tpu.memory_space<vmem>>, vector<1x1x1x1x5x3xf32>
    %74 = vector.shape_cast %73 : vector<1x1x1x1x5x3xf32> to vector<5x3xf32>
    %c0_175 = arith.constant 0 : index
    %c1_176 = arith.constant 1 : index
    %c2_177 = arith.constant 2 : index
    %c2_178 = arith.constant 2 : index
    %c0_179 = arith.constant 0 : index
    %c0_180 = arith.constant 0 : index
    %75 = vector.load %arg2[%c0_175, %c1_176, %c2_177, %c2_178, %c0_179, %c0_180] : memref<1x4x5x3x5x3xf32, #tpu.memory_space<vmem>>, vector<1x1x1x1x5x3xf32>
    %76 = vector.shape_cast %75 : vector<1x1x1x1x5x3xf32> to vector<5x3xf32>
    %77 = tpu.concatenate %72, %74, %76 in 1 : vector<5x3xf32>, vector<5x3xf32>, vector<5x3xf32> -> vector<5x9xf32>
    %c0_181 = arith.constant 0 : index
    %c2_182 = arith.constant 2 : index
    %c2_183 = arith.constant 2 : index
    %c0_184 = arith.constant 0 : index
    %c0_185 = arith.constant 0 : index
    %c0_186 = arith.constant 0 : index
    %78 = vector.load %arg2[%c0_181, %c2_182, %c2_183, %c0_184, %c0_185, %c0_186] : memref<1x4x5x3x5x3xf32, #tpu.memory_space<vmem>>, vector<1x1x1x1x5x3xf32>
    %79 = vector.shape_cast %78 : vector<1x1x1x1x5x3xf32> to vector<5x3xf32>
    %c0_187 = arith.constant 0 : index
    %c2_188 = arith.constant 2 : index
    %c2_189 = arith.constant 2 : index
    %c1_190 = arith.constant 1 : index
    %c0_191 = arith.constant 0 : index
    %c0_192 = arith.constant 0 : index
    %80 = vector.load %arg2[%c0_187, %c2_188, %c2_189, %c1_190, %c0_191, %c0_192] : memref<1x4x5x3x5x3xf32, #tpu.memory_space<vmem>>, vector<1x1x1x1x5x3xf32>
    %81 = vector.shape_cast %80 : vector<1x1x1x1x5x3xf32> to vector<5x3xf32>
    %c0_193 = arith.constant 0 : index
    %c2_194 = arith.constant 2 : index
    %c2_195 = arith.constant 2 : index
    %c2_196 = arith.constant 2 : index
    %c0_197 = arith.constant 0 : index
    %c0_198 = arith.constant 0 : index
    %82 = vector.load %arg2[%c0_193, %c2_194, %c2_195, %c2_196, %c0_197, %c0_198] : memref<1x4x5x3x5x3xf32, #tpu.memory_space<vmem>>, vector<1x1x1x1x5x3xf32>
    %83 = vector.shape_cast %82 : vector<1x1x1x1x5x3xf32> to vector<5x3xf32>
    %84 = tpu.concatenate %79, %81, %83 in 1 : vector<5x3xf32>, vector<5x3xf32>, vector<5x3xf32> -> vector<5x9xf32>
    %c0_199 = arith.constant 0 : index
    %c3_200 = arith.constant 3 : index
    %c2_201 = arith.constant 2 : index
    %c0_202 = arith.constant 0 : index
    %c0_203 = arith.constant 0 : index
    %c0_204 = arith.constant 0 : index
    %85 = vector.load %arg2[%c0_199, %c3_200, %c2_201, %c0_202, %c0_203, %c0_204] : memref<1x4x5x3x5x3xf32, #tpu.memory_space<vmem>>, vector<1x1x1x1x5x3xf32>
    %86 = vector.shape_cast %85 : vector<1x1x1x1x5x3xf32> to vector<5x3xf32>
    %c0_205 = arith.constant 0 : index
    %c3_206 = arith.constant 3 : index
    %c2_207 = arith.constant 2 : index
    %c1_208 = arith.constant 1 : index
    %c0_209 = arith.constant 0 : index
    %c0_210 = arith.constant 0 : index
    %87 = vector.load %arg2[%c0_205, %c3_206, %c2_207, %c1_208, %c0_209, %c0_210] : memref<1x4x5x3x5x3xf32, #tpu.memory_space<vmem>>, vector<1x1x1x1x5x3xf32>
    %88 = vector.shape_cast %87 : vector<1x1x1x1x5x3xf32> to vector<5x3xf32>
    %c0_211 = arith.constant 0 : index
    %c3_212 = arith.constant 3 : index
    %c2_213 = arith.constant 2 : index
    %c2_214 = arith.constant 2 : index
    %c0_215 = arith.constant 0 : index
    %c0_216 = arith.constant 0 : index
    %89 = vector.load %arg2[%c0_211, %c3_212, %c2_213, %c2_214, %c0_215, %c0_216] : memref<1x4x5x3x5x3xf32, #tpu.memory_space<vmem>>, vector<1x1x1x1x5x3xf32>
    %90 = vector.shape_cast %89 : vector<1x1x1x1x5x3xf32> to vector<5x3xf32>
    %91 = tpu.concatenate %86, %88, %90 in 1 : vector<5x3xf32>, vector<5x3xf32>, vector<5x3xf32> -> vector<5x9xf32>
    %92 = tpu.concatenate %70, %77, %84, %91 in 1 : vector<5x9xf32>, vector<5x9xf32>, vector<5x9xf32>, vector<5x9xf32> -> vector<5x36xf32>
    %c0_217 = arith.constant 0 : index
    %c10 = arith.constant 10 : index
    %c0_218 = arith.constant 0 : index
    %93 = vector.load %arg3[%c0_217, %c10, %c0_218] : memref<1x25x36xf32, #tpu.memory_space<vmem>>, vector<1x5x36xf32>
    %94 = vector.shape_cast %93 : vector<1x5x36xf32> to vector<5x36xf32>
    %95 = vector.shape_cast %92 : vector<5x36xf32> to vector<1x5x36xf32>
    tpu.vector_store %arg3[%c0_217, %c10, %c0_218], %95 {strides = array<i32>} : memref<1x25x36xf32, #tpu.memory_space<vmem>>, vector<1x5x36xf32>,
    %c0_219 = arith.constant 0 : index
    %c0_220 = arith.constant 0 : index
    %c3_221 = arith.constant 3 : index
    %c0_222 = arith.constant 0 : index
    %c0_223 = arith.constant 0 : index
    %c0_224 = arith.constant 0 : index
    %96 = vector.load %arg2[%c0_219, %c0_220, %c3_221, %c0_222, %c0_223, %c0_224] : memref<1x4x5x3x5x3xf32, #tpu.memory_space<vmem>>, vector<1x1x1x1x5x3xf32>
    %97 = vector.shape_cast %96 : vector<1x1x1x1x5x3xf32> to vector<5x3xf32>
    %c0_225 = arith.constant 0 : index
    %c0_226 = arith.constant 0 : index
    %c3_227 = arith.constant 3 : index
    %c1_228 = arith.constant 1 : index
    %c0_229 = arith.constant 0 : index
    %c0_230 = arith.constant 0 : index
    %98 = vector.load %arg2[%c0_225, %c0_226, %c3_227, %c1_228, %c0_229, %c0_230] : memref<1x4x5x3x5x3xf32, #tpu.memory_space<vmem>>, vector<1x1x1x1x5x3xf32>
    %99 = vector.shape_cast %98 : vector<1x1x1x1x5x3xf32> to vector<5x3xf32>
    %c0_231 = arith.constant 0 : index
    %c0_232 = arith.constant 0 : index
    %c3_233 = arith.constant 3 : index
    %c2_234 = arith.constant 2 : index
    %c0_235 = arith.constant 0 : index
    %c0_236 = arith.constant 0 : index
    %100 = vector.load %arg2[%c0_231, %c0_232, %c3_233, %c2_234, %c0_235, %c0_236] : memref<1x4x5x3x5x3xf32, #tpu.memory_space<vmem>>, vector<1x1x1x1x5x3xf32>
    %101 = vector.shape_cast %100 : vector<1x1x1x1x5x3xf32> to vector<5x3xf32>
    %102 = tpu.concatenate %97, %99, %101 in 1 : vector<5x3xf32>, vector<5x3xf32>, vector<5x3xf32> -> vector<5x9xf32>
    %c0_237 = arith.constant 0 : index
    %c1_238 = arith.constant 1 : index
    %c3_239 = arith.constant 3 : index
    %c0_240 = arith.constant 0 : index
    %c0_241 = arith.constant 0 : index
    %c0_242 = arith.constant 0 : index
    %103 = vector.load %arg2[%c0_237, %c1_238, %c3_239, %c0_240, %c0_241, %c0_242] : memref<1x4x5x3x5x3xf32, #tpu.memory_space<vmem>>, vector<1x1x1x1x5x3xf32>
    %104 = vector.shape_cast %103 : vector<1x1x1x1x5x3xf32> to vector<5x3xf32>
    %c0_243 = arith.constant 0 : index
    %c1_244 = arith.constant 1 : index
    %c3_245 = arith.constant 3 : index
    %c1_246 = arith.constant 1 : index
    %c0_247 = arith.constant 0 : index
    %c0_248 = arith.constant 0 : index
    %105 = vector.load %arg2[%c0_243, %c1_244, %c3_245, %c1_246, %c0_247, %c0_248] : memref<1x4x5x3x5x3xf32, #tpu.memory_space<vmem>>, vector<1x1x1x1x5x3xf32>
    %106 = vector.shape_cast %105 : vector<1x1x1x1x5x3xf32> to vector<5x3xf32>
    %c0_249 = arith.constant 0 : index
    %c1_250 = arith.constant 1 : index
    %c3_251 = arith.constant 3 : index
    %c2_252 = arith.constant 2 : index
    %c0_253 = arith.constant 0 : index
    %c0_254 = arith.constant 0 : index
    %107 = vector.load %arg2[%c0_249, %c1_250, %c3_251, %c2_252, %c0_253, %c0_254] : memref<1x4x5x3x5x3xf32, #tpu.memory_space<vmem>>, vector<1x1x1x1x5x3xf32>
    %108 = vector.shape_cast %107 : vector<1x1x1x1x5x3xf32> to vector<5x3xf32>
    %109 = tpu.concatenate %104, %106, %108 in 1 : vector<5x3xf32>, vector<5x3xf32>, vector<5x3xf32> -> vector<5x9xf32>
    %c0_255 = arith.constant 0 : index
    %c2_256 = arith.constant 2 : index
    %c3_257 = arith.constant 3 : index
    %c0_258 = arith.constant 0 : index
    %c0_259 = arith.constant 0 : index
    %c0_260 = arith.constant 0 : index
    %110 = vector.load %arg2[%c0_255, %c2_256, %c3_257, %c0_258, %c0_259, %c0_260] : memref<1x4x5x3x5x3xf32, #tpu.memory_space<vmem>>, vector<1x1x1x1x5x3xf32>
    %111 = vector.shape_cast %110 : vector<1x1x1x1x5x3xf32> to vector<5x3xf32>
    %c0_261 = arith.constant 0 : index
    %c2_262 = arith.constant 2 : index
    %c3_263 = arith.constant 3 : index
    %c1_264 = arith.constant 1 : index
    %c0_265 = arith.constant 0 : index
    %c0_266 = arith.constant 0 : index
    %112 = vector.load %arg2[%c0_261, %c2_262, %c3_263, %c1_264, %c0_265, %c0_266] : memref<1x4x5x3x5x3xf32, #tpu.memory_space<vmem>>, vector<1x1x1x1x5x3xf32>
    %113 = vector.shape_cast %112 : vector<1x1x1x1x5x3xf32> to vector<5x3xf32>
    %c0_267 = arith.constant 0 : index
    %c2_268 = arith.constant 2 : index
    %c3_269 = arith.constant 3 : index
    %c2_270 = arith.constant 2 : index
    %c0_271 = arith.constant 0 : index
    %c0_272 = arith.constant 0 : index
    %114 = vector.load %arg2[%c0_267, %c2_268, %c3_269, %c2_270, %c0_271, %c0_272] : memref<1x4x5x3x5x3xf32, #tpu.memory_space<vmem>>, vector<1x1x1x1x5x3xf32>
    %115 = vector.shape_cast %114 : vector<1x1x1x1x5x3xf32> to vector<5x3xf32>
    %116 = tpu.concatenate %111, %113, %115 in 1 : vector<5x3xf32>, vector<5x3xf32>, vector<5x3xf32> -> vector<5x9xf32>
    %c0_273 = arith.constant 0 : index
    %c3_274 = arith.constant 3 : index
    %c3_275 = arith.constant 3 : index
    %c0_276 = arith.constant 0 : index
    %c0_277 = arith.constant 0 : index
    %c0_278 = arith.constant 0 : index
    %117 = vector.load %arg2[%c0_273, %c3_274, %c3_275, %c0_276, %c0_277, %c0_278] : memref<1x4x5x3x5x3xf32, #tpu.memory_space<vmem>>, vector<1x1x1x1x5x3xf32>
    %118 = vector.shape_cast %117 : vector<1x1x1x1x5x3xf32> to vector<5x3xf32>
    %c0_279 = arith.constant 0 : index
    %c3_280 = arith.constant 3 : index
    %c3_281 = arith.constant 3 : index
    %c1_282 = arith.constant 1 : index
    %c0_283 = arith.constant 0 : index
    %c0_284 = arith.constant 0 : index
    %119 = vector.load %arg2[%c0_279, %c3_280, %c3_281, %c1_282, %c0_283, %c0_284] : memref<1x4x5x3x5x3xf32, #tpu.memory_space<vmem>>, vector<1x1x1x1x5x3xf32>
    %120 = vector.shape_cast %119 : vector<1x1x1x1x5x3xf32> to vector<5x3xf32>
    %c0_285 = arith.constant 0 : index
    %c3_286 = arith.constant 3 : index
    %c3_287 = arith.constant 3 : index
    %c2_288 = arith.constant 2 : index
    %c0_289 = arith.constant 0 : index
    %c0_290 = arith.constant 0 : index
    %121 = vector.load %arg2[%c0_285, %c3_286, %c3_287, %c2_288, %c0_289, %c0_290] : memref<1x4x5x3x5x3xf32, #tpu.memory_space<vmem>>, vector<1x1x1x1x5x3xf32>
    %122 = vector.shape_cast %121 : vector<1x1x1x1x5x3xf32> to vector<5x3xf32>
    %123 = tpu.concatenate %118, %120, %122 in 1 : vector<5x3xf32>, vector<5x3xf32>, vector<5x3xf32> -> vector<5x9xf32>
    %124 = tpu.concatenate %102, %109, %116, %123 in 1 : vector<5x9xf32>, vector<5x9xf32>, vector<5x9xf32>, vector<5x9xf32> -> vector<5x36xf32>
    %c0_291 = arith.constant 0 : index
    %c15 = arith.constant 15 : index
    %c0_292 = arith.constant 0 : index
    %125 = vector.load %arg3[%c0_291, %c15, %c0_292] : memref<1x25x36xf32, #tpu.memory_space<vmem>>, vector<1x5x36xf32>
    %126 = vector.shape_cast %125 : vector<1x5x36xf32> to vector<5x36xf32>
    %127 = vector.shape_cast %124 : vector<5x36xf32> to vector<1x5x36xf32>
    tpu.vector_store %arg3[%c0_291, %c15, %c0_292], %127 {strides = array<i32>} : memref<1x25x36xf32, #tpu.memory_space<vmem>>, vector<1x5x36xf32>,
    %c0_293 = arith.constant 0 : index
    %c0_294 = arith.constant 0 : index
    %c4 = arith.constant 4 : index
    %c0_295 = arith.constant 0 : index
    %c0_296 = arith.constant 0 : index
    %c0_297 = arith.constant 0 : index
    %128 = vector.load %arg2[%c0_293, %c0_294, %c4, %c0_295, %c0_296, %c0_297] : memref<1x4x5x3x5x3xf32, #tpu.memory_space<vmem>>, vector<1x1x1x1x5x3xf32>
    %129 = vector.shape_cast %128 : vector<1x1x1x1x5x3xf32> to vector<5x3xf32>
    %c0_298 = arith.constant 0 : index
    %c0_299 = arith.constant 0 : index
    %c4_300 = arith.constant 4 : index
    %c1_301 = arith.constant 1 : index
    %c0_302 = arith.constant 0 : index
    %c0_303 = arith.constant 0 : index
    %130 = vector.load %arg2[%c0_298, %c0_299, %c4_300, %c1_301, %c0_302, %c0_303] : memref<1x4x5x3x5x3xf32, #tpu.memory_space<vmem>>, vector<1x1x1x1x5x3xf32>
    %131 = vector.shape_cast %130 : vector<1x1x1x1x5x3xf32> to vector<5x3xf32>
    %c0_304 = arith.constant 0 : index
    %c0_305 = arith.constant 0 : index
    %c4_306 = arith.constant 4 : index
    %c2_307 = arith.constant 2 : index
    %c0_308 = arith.constant 0 : index
    %c0_309 = arith.constant 0 : index
    %132 = vector.load %arg2[%c0_304, %c0_305, %c4_306, %c2_307, %c0_308, %c0_309] : memref<1x4x5x3x5x3xf32, #tpu.memory_space<vmem>>, vector<1x1x1x1x5x3xf32>
    %133 = vector.shape_cast %132 : vector<1x1x1x1x5x3xf32> to vector<5x3xf32>
    %134 = tpu.concatenate %129, %131, %133 in 1 : vector<5x3xf32>, vector<5x3xf32>, vector<5x3xf32> -> vector<5x9xf32>
    %c0_310 = arith.constant 0 : index
    %c1_311 = arith.constant 1 : index
    %c4_312 = arith.constant 4 : index
    %c0_313 = arith.constant 0 : index
    %c0_314 = arith.constant 0 : index
    %c0_315 = arith.constant 0 : index
    %135 = vector.load %arg2[%c0_310, %c1_311, %c4_312, %c0_313, %c0_314, %c0_315] : memref<1x4x5x3x5x3xf32, #tpu.memory_space<vmem>>, vector<1x1x1x1x5x3xf32>
    %136 = vector.shape_cast %135 : vector<1x1x1x1x5x3xf32> to vector<5x3xf32>
    %c0_316 = arith.constant 0 : index
    %c1_317 = arith.constant 1 : index
    %c4_318 = arith.constant 4 : index
    %c1_319 = arith.constant 1 : index
    %c0_320 = arith.constant 0 : index
    %c0_321 = arith.constant 0 : index
    %137 = vector.load %arg2[%c0_316, %c1_317, %c4_318, %c1_319, %c0_320, %c0_321] : memref<1x4x5x3x5x3xf32, #tpu.memory_space<vmem>>, vector<1x1x1x1x5x3xf32>
    %138 = vector.shape_cast %137 : vector<1x1x1x1x5x3xf32> to vector<5x3xf32>
    %c0_322 = arith.constant 0 : index
    %c1_323 = arith.constant 1 : index
    %c4_324 = arith.constant 4 : index
    %c2_325 = arith.constant 2 : index
    %c0_326 = arith.constant 0 : index
    %c0_327 = arith.constant 0 : index
    %139 = vector.load %arg2[%c0_322, %c1_323, %c4_324, %c2_325, %c0_326, %c0_327] : memref<1x4x5x3x5x3xf32, #tpu.memory_space<vmem>>, vector<1x1x1x1x5x3xf32>
    %140 = vector.shape_cast %139 : vector<1x1x1x1x5x3xf32> to vector<5x3xf32>
    %141 = tpu.concatenate %136, %138, %140 in 1 : vector<5x3xf32>, vector<5x3xf32>, vector<5x3xf32> -> vector<5x9xf32>
    %c0_328 = arith.constant 0 : index
    %c2_329 = arith.constant 2 : index
    %c4_330 = arith.constant 4 : index
    %c0_331 = arith.constant 0 : index
    %c0_332 = arith.constant 0 : index
    %c0_333 = arith.constant 0 : index
    %142 = vector.load %arg2[%c0_328, %c2_329, %c4_330, %c0_331, %c0_332, %c0_333] : memref<1x4x5x3x5x3xf32, #tpu.memory_space<vmem>>, vector<1x1x1x1x5x3xf32>
    %143 = vector.shape_cast %142 : vector<1x1x1x1x5x3xf32> to vector<5x3xf32>
    %c0_334 = arith.constant 0 : index
    %c2_335 = arith.constant 2 : index
    %c4_336 = arith.constant 4 : index
    %c1_337 = arith.constant 1 : index
    %c0_338 = arith.constant 0 : index
    %c0_339 = arith.constant 0 : index
    %144 = vector.load %arg2[%c0_334, %c2_335, %c4_336, %c1_337, %c0_338, %c0_339] : memref<1x4x5x3x5x3xf32, #tpu.memory_space<vmem>>, vector<1x1x1x1x5x3xf32>
    %145 = vector.shape_cast %144 : vector<1x1x1x1x5x3xf32> to vector<5x3xf32>
    %c0_340 = arith.constant 0 : index
    %c2_341 = arith.constant 2 : index
    %c4_342 = arith.constant 4 : index
    %c2_343 = arith.constant 2 : index
    %c0_344 = arith.constant 0 : index
    %c0_345 = arith.constant 0 : index
    %146 = vector.load %arg2[%c0_340, %c2_341, %c4_342, %c2_343, %c0_344, %c0_345] : memref<1x4x5x3x5x3xf32, #tpu.memory_space<vmem>>, vector<1x1x1x1x5x3xf32>
    %147 = vector.shape_cast %146 : vector<1x1x1x1x5x3xf32> to vector<5x3xf32>
    %148 = tpu.concatenate %143, %145, %147 in 1 : vector<5x3xf32>, vector<5x3xf32>, vector<5x3xf32> -> vector<5x9xf32>
    %c0_346 = arith.constant 0 : index
    %c3_347 = arith.constant 3 : index
    %c4_348 = arith.constant 4 : index
    %c0_349 = arith.constant 0 : index
    %c0_350 = arith.constant 0 : index
    %c0_351 = arith.constant 0 : index
    %149 = vector.load %arg2[%c0_346, %c3_347, %c4_348, %c0_349, %c0_350, %c0_351] : memref<1x4x5x3x5x3xf32, #tpu.memory_space<vmem>>, vector<1x1x1x1x5x3xf32>
    %150 = vector.shape_cast %149 : vector<1x1x1x1x5x3xf32> to vector<5x3xf32>
    %c0_352 = arith.constant 0 : index
    %c3_353 = arith.constant 3 : index
    %c4_354 = arith.constant 4 : index
    %c1_355 = arith.constant 1 : index
    %c0_356 = arith.constant 0 : index
    %c0_357 = arith.constant 0 : index
    %151 = vector.load %arg2[%c0_352, %c3_353, %c4_354, %c1_355, %c0_356, %c0_357] : memref<1x4x5x3x5x3xf32, #tpu.memory_space<vmem>>, vector<1x1x1x1x5x3xf32>
    %152 = vector.shape_cast %151 : vector<1x1x1x1x5x3xf32> to vector<5x3xf32>
    %c0_358 = arith.constant 0 : index
    %c3_359 = arith.constant 3 : index
    %c4_360 = arith.constant 4 : index
    %c2_361 = arith.constant 2 : index
    %c0_362 = arith.constant 0 : index
    %c0_363 = arith.constant 0 : index
    %153 = vector.load %arg2[%c0_358, %c3_359, %c4_360, %c2_361, %c0_362, %c0_363] : memref<1x4x5x3x5x3xf32, #tpu.memory_space<vmem>>, vector<1x1x1x1x5x3xf32>
    %154 = vector.shape_cast %153 : vector<1x1x1x1x5x3xf32> to vector<5x3xf32>
    %155 = tpu.concatenate %150, %152, %154 in 1 : vector<5x3xf32>, vector<5x3xf32>, vector<5x3xf32> -> vector<5x9xf32>
    %156 = tpu.concatenate %134, %141, %148, %155 in 1 : vector<5x9xf32>, vector<5x9xf32>, vector<5x9xf32>, vector<5x9xf32> -> vector<5x36xf32>
    %c0_364 = arith.constant 0 : index
    %c20 = arith.constant 20 : index
    %c0_365 = arith.constant 0 : index
    %157 = vector.load %arg3[%c0_364, %c20, %c0_365] : memref<1x25x36xf32, #tpu.memory_space<vmem>>, vector<1x5x36xf32>
    %158 = vector.shape_cast %157 : vector<1x5x36xf32> to vector<5x36xf32>
    %159 = vector.shape_cast %156 : vector<5x36xf32> to vector<1x5x36xf32>
    tpu.vector_store %arg3[%c0_364, %c20, %c0_365], %159 {strides = array<i32>} : memref<1x25x36xf32, #tpu.memory_space<vmem>>, vector<1x5x36xf32>,
    return
  }
  func.func @transform_0(%arg0: i32, %arg1: i32) -> (i32, i32, i32, i32, i32, i32) {
    %c0_i32 = arith.constant 0 : i32
    %c0_i32_0 = arith.constant 0 : i32
    %c0_i32_1 = arith.constant 0 : i32
    %c0_i32_2 = arith.constant 0 : i32
    %c0_i32_3 = arith.constant 0 : i32
    return %arg0, %c0_i32, %arg1, %c0_i32_0, %c0_i32_1, %c0_i32_2 : i32, i32, i32, i32, i32, i32
  }
  func.func @transform_1(%arg0: i32, %arg1: i32) -> (i32, i32, i32) {
    %c0_i32 = arith.constant 0 : i32
    %c0_i32_0 = arith.constant 0 : i32
    return %arg0, %arg1, %c0_i32 : i32, i32, i32
  }
}

</mosaic_0001>

<llo_original>
// kernel: tpu_custom_call.1
$region0: #{tpu_custom_call.1}
  #allocation0 [shape = 'u32[]', space=smem, size = 0x4, offset = 0x4, fixed_abs, tag = 'smem constant byte address 0x4 - core index']
  #allocation1 [shape = 'u32[72,128]{1,0:T(1,128)}', space=vmem, size = 0x9000, scoped, tag = 'internal scratch']
  %s0 = inlined_call_operand.vmem [shape: f32[2,4,5,3,5,3], index: 0, kind: input, shape index: {}]
  %s1 = inlined_call_operand.vmem [shape: f32[2,25,36], index: 1, kind: output, shape index: {}]
  %s2 = sld [smem:[#allocation0]]
  $region37: #{tpu_custom_call.1} parent=0
    _
  %s4 = ssub.s32 1, %s2
  %s5 = scalar_select 0, %s4, %s2
  loop: start=0, step=1, limit=4
  $region2: #{tpu_custom_call.1} parent=0 // loop_pre_header
    _
  $region3: #{tpu_custom_call.1} parent=0 // loop_header
    %s7 = sphi 0, %s11
    %p8 = scmp.ge.s32.totalorder %s7, 4
    %s14 = sphi 0, %s26
    %s15 = sphi 0, %s22
    %s16 = sphi 0, %s14
    %s17 = sphi 0, %s15
    %s18 = sphi 0, %s16
    %s19 = sphi 0, %s17
    %s31 = sphi 0, %s33
    %s34 = sphi 0, %s31
    %s35 = sphi 0, %s34
    %s51 = sphi 0, %s35
    %s59 = sphi 0, %s61
    %s62 = sphi 0, %s59
    %s63 = sphi 0, %s62
    %s79 = sphi 0, %s63
  $region4: #{tpu_custom_call.1} parent=0 // loop_header_branch
    %10 = sbr.rel (%p8) target = $region8
  $region5: #{tpu_custom_call.1} parent=0 // loop_body
    %s12 = ssub.s32 %s7, 1
    %s13 = ssub.s32 %s7, 2
    %s20 = sadd.s32 1, %s15
    %p21 = scmp.ge.s32.totalorder %s20, 1
    %s22 = scalar_select %p21, 0, %s20
    %s23 = sadd.s32 1, %s14
    %s24 = scalar_select %p21, %s23, %s14
    %p25 = scmp.ge.s32.totalorder %s24, 2
    %s26 = scalar_select %p25, 0, %s24
    %s27 = ssub.s32 %s14, %s26
    %s28 = ssub.s32 %s15, %s22
    %s29 = sor.u32 %s27, %s28
    %p30 = scmp.eq.s32.totalorder %s29, 0
    %s32 = sadd.s32 %s31, 1
    %s33 = scalar_select %p30, %s31, %s32
    %p36 = pneg %p30
    %p37 = scmp.eq.s32.totalorder %s7, 1
    %p38 = por %p36, %p37
    %p39 = scmp.ne.s32.totalorder %s31, %s34
    %p40 = scmp.eq.s32.totalorder %s7, 0
    %p41 = por %p39, %p40
    %p42 = scmp.ne.s32.totalorder %s31, %s34
    %p43 = scmp.eq.s32.totalorder %s12, 1
    %p44 = por %p42, %p43
    %p45 = scmp.ne.s32.totalorder %s34, %s35
    %p46 = scmp.eq.s32.totalorder %s12, 0
    %p47 = por %p45, %p46
    %p48 = scmp.ne.s32.totalorder %s34, %s35
    %p49 = scmp.eq.s32.totalorder %s13, 1
    %p50 = por %p48, %p49
    %p52 = scmp.ne.s32.totalorder %s35, %s51
    %p53 = scmp.eq.s32.totalorder %s13, 0
    %p54 = por %p52, %p53
    %s55 = ssub.s32 %s14, %s26
    %s56 = ssub.s32 %s15, %s22
    %s57 = sor.u32 %s55, %s56
    %p58 = scmp.eq.s32.totalorder %s57, 0
    %s60 = sadd.s32 %s59, 1
    %s61 = scalar_select %p58, %s59, %s60
    %p64 = pneg %p58
    %p65 = scmp.eq.s32.totalorder %s7, 1
    %p66 = por %p64, %p65
    %p67 = scmp.ne.s32.totalorder %s59, %s62
    %p68 = scmp.eq.s32.totalorder %s7, 0
    %p69 = por %p67, %p68
    %p70 = scmp.ne.s32.totalorder %s59, %s62
    %p71 = scmp.eq.s32.totalorder %s12, 1
    %p72 = por %p70, %p71
    %p73 = scmp.ne.s32.totalorder %s62, %s63
    %p74 = scmp.eq.s32.totalorder %s12, 0
    %p75 = por %p73, %p74
    %p76 = scmp.ne.s32.totalorder %s62, %s63
    %p77 = scmp.eq.s32.totalorder %s13, 1
    %p78 = por %p76, %p77
    %p80 = scmp.ne.s32.totalorder %s63, %s79
    %p81 = scmp.eq.s32.totalorder %s13, 0
    %p82 = por %p80, %p81
    %p83 = scmp.le.s32.totalorder 1, %s7
    %p84 = scmp.lt.s32.totalorder %s7, 3
    %p85 = pnand %p83, %p84
    %p86 = pneg %p85
    // Predicated region
    $region9: #{tpu_custom_call.1} parent=5 // pred_check
      _
    $region10: #{tpu_custom_call.1} parent=5 // pred_check_branch
      %88 = sbr.rel (%p85) target = $region12
    $region11: #{tpu_custom_call.1} parent=5 // pred_region
      %s89 = ssub.s32 %s7, 1
    $region12: #{tpu_custom_call.1} parent=5 // pred_fallthru
      _
    %p90 = scmp.lt.s32.totalorder %s7, 2
    // Predicated region
    $region13: #{tpu_custom_call.1} parent=5 // pred_check
      %p91 = pneg %p90
    $region14: #{tpu_custom_call.1} parent=5 // pred_check_branch
      %93 = sbr.rel (%p91) target = $region16
    $region15: #{tpu_custom_call.1} parent=5 // pred_region
      // Predicated region
      $region17: #{tpu_custom_call.1} parent=15 // pred_check
        %p94 = pneg %p41
      $region18: #{tpu_custom_call.1} parent=15 // pred_check_branch
        %96 = sbr.rel (%p94) target = $region20
      $region19: #{tpu_custom_call.1} parent=15 // pred_region
        %s97 = smul.u32 5, %s15
        %p98 = scmp.lt.s32.totalorder %s14, 1
        %s99 = scalar_select %p98, %s14, 1
        %p100 = scmp.lt.s32.totalorder %s97, 4
        %s101 = scalar_select %p100, %s97, 4
        %s102 = smul.addr %s101, 3
        %s103 = smul.addr %s99, 60
        %s104 = sadd.s32 %s102, %s103
        %s105 = smul.addr %s104, 8
        %s106 = scalar_lea.vmem %s0, %s105
        %s107 = smul.u32 5, %s15
      $region20: #{tpu_custom_call.1} parent=15 // pred_fallthru
        _
    $region16: #{tpu_custom_call.1} parent=5 // pred_fallthru
      _
    %p108 = scmp.le.s32.totalorder 1, %s7
    %p109 = scmp.lt.s32.totalorder %s7, 3
    %p110 = pnand %p108, %p109
    %p111 = pneg %p110
    // Predicated region
    $region21: #{tpu_custom_call.1} parent=5 // pred_check
      _
    $region22: #{tpu_custom_call.1} parent=5 // pred_check_branch
      %113 = sbr.rel (%p110) target = $region24
    $region23: #{tpu_custom_call.1} parent=5 // pred_region
      %s114 = ssub.s32 %s7, 1
      %s115 = smul.u32 5, %s17
      %p116 = scmp.lt.s32.totalorder %s16, 1
      %s117 = scalar_select %p116, %s16, 1
      %p118 = scmp.lt.s32.totalorder %s115, 4
      %s119 = scalar_select %p118, %s115, 4
      %s120 = smul.addr %s119, 3
      %s121 = smul.addr %s117, 60
      %s122 = sadd.s32 %s120, %s121
      %s123 = smul.addr %s122, 8
      %s124 = scalar_lea.vmem %s0, %s123
      %p125 = pneg %p47
      %p126 = pneg %p44
      %p127 = pneg %p75
      %p128 = pneg %p72
      %s129 = smul.u32 4, %s17
      %p130 = scmp.lt.s32.totalorder %s16, 1
      %s131 = scalar_select %p130, %s16, 1
      %p132 = scmp.lt.s32.totalorder %s129, 3
      %s133 = scalar_select %p132, %s129, 3
      %s134 = smul.addr %s131, 4
      %s135 = sadd.s32 %s133, %s134
      %s136 = smul.addr %s135, 8
      %s137 = scalar_lea.vmem %s1, %s136
      %s138 = smul.u32 5, %s17
      %p139 = scmp.lt.s32.totalorder %s16, 1
      %s140 = scalar_select %p139, %s16, 1
      %p141 = scmp.lt.s32.totalorder %s138, 4
      %s142 = scalar_select %p141, %s138, 4
      %s143 = smul.addr %s142, 3
      %s144 = smul.addr %s140, 60
      %s145 = sadd.s32 %s143, %s144
      %s146 = smul.addr %s145, 8
      %s147 = scalar_lea.vmem %s0, %s146
      %s148 = smul.u32 5, %s17
      %s149 = smul.u32 4, %s17
      %p150 = scmp.lt.s32.totalorder %s16, 1
      %s151 = scalar_select %p150, %s16, 1
      %p152 = scmp.lt.s32.totalorder %s149, 3
      %s153 = scalar_select %p152, %s149, 3
      %s154 = smul.addr %s151, 4
      %s155 = sadd.s32 %s153, %s154
      %s156 = smul.addr %s155, 8
      %s157 = scalar_lea.vmem %s1, %s156
      %s158 = smul.u32 4, %s17
      %v159 = vld [vmem:[%s147] sm:$0x1f]
      %s160 = scalar_lea.vmem %s147, 8
      %v161 = vld [vmem:[%s160] sm:$0x1f]
      %s162 = scalar_lea.vmem %s147, 16
      %v163 = vld [vmem:[%s162] sm:$0x1f]
      %165 = vrot.lane.b32.xlu0 %v161, 3
      %v166 = vpop.permute.xlu0 %165
      %169 = vrot.lane.b32.xlu0 %v163, 6
      %v170 = vpop.permute.xlu0 %169
      %vm172 = vcmask 23552
      %v173 = vsel %vm172, %v159, %v166
      %vm174 = vcmask 48128
      %v175 = vsel %vm174, %v173, %v170
      %s176 = scalar_lea.vmem %s147, 120
      %v177 = vld [vmem:[%s176] sm:$0x1f]
      %s178 = scalar_lea.vmem %s147, 128
      %v179 = vld [vmem:[%s178] sm:$0x1f]
      %s180 = scalar_lea.vmem %s147, 136
      %v181 = vld [vmem:[%s180] sm:$0x1f]
      %183 = vrot.lane.b32.xlu0 %v179, 3
      %v184 = vpop.permute.xlu0 %183
      %187 = vrot.lane.b32.xlu0 %v181, 6
      %v188 = vpop.permute.xlu0 %187
      %v190 = vsel %vm172, %v177, %v184
      %v191 = vsel %vm174, %v190, %v188
      %s192 = scalar_lea.vmem %s147, 240
      %v193 = vld [vmem:[%s192] sm:$0x1f]
      %s194 = scalar_lea.vmem %s147, 248
      %v195 = vld [vmem:[%s194] sm:$0x1f]
      %s196 = scalar_lea.vmem %s147, 256
      %v197 = vld [vmem:[%s196] sm:$0x1f]
      %199 = vrot.lane.b32.xlu0 %v195, 3
      %v200 = vpop.permute.xlu0 %199
      %203 = vrot.lane.b32.xlu0 %v197, 6
      %v204 = vpop.permute.xlu0 %203
      %v206 = vsel %vm172, %v193, %v200
      %v207 = vsel %vm174, %v206, %v204
      %s208 = scalar_lea.vmem %s147, 360
      %v209 = vld [vmem:[%s208] sm:$0x1f]
      %s210 = scalar_lea.vmem %s147, 368
      %v211 = vld [vmem:[%s210] sm:$0x1f]
      %s212 = scalar_lea.vmem %s147, 376
      %v213 = vld [vmem:[%s212] sm:$0x1f]
      %215 = vrot.lane.b32.xlu0 %v211, 3
      %v216 = vpop.permute.xlu0 %215
      %219 = vrot.lane.b32.xlu0 %v213, 6
      %v220 = vpop.permute.xlu0 %219
      %v222 = vsel %vm172, %v209, %v216
      %v223 = vsel %vm174, %v222, %v220
      %225 = vrot.lane.b32.xlu0 %v191, 9
      %v226 = vpop.permute.xlu0 %225
      %229 = vrot.lane.b32.xlu0 %v207, 18
      %v230 = vpop.permute.xlu0 %229
      %233 = vrot.lane.b32.xlu0 %v223, 27
      %v234 = vpop.permute.xlu0 %233
      %vm236 = vcmask 72704
      %v237 = vsel %vm236, %v175, %v226
      %vm238 = vcmask 146432
      %v239 = vsel %vm238, %v237, %v230
      %vm240 = vcmask 220160
      %v241 = vsel %vm240, %v239, %v234
      %vm242 = vcmask 290816
      %243 = vst.msk [vmem:[%s157] sm:$0x1f] %vm242, %v241
      %s244 = scalar_lea.vmem %s147, 24
      %v245 = vld [vmem:[%s244] sm:$0x1f]
      %s246 = scalar_lea.vmem %s147, 32
      %v247 = vld [vmem:[%s246] sm:$0x1f]
      %s248 = scalar_lea.vmem %s147, 40
      %v249 = vld [vmem:[%s248] sm:$0x1f]
      %251 = vrot.lane.b32.xlu0 %v247, 3
      %v252 = vpop.permute.xlu0 %251
      %255 = vrot.lane.b32.xlu0 %v249, 6
      %v256 = vpop.permute.xlu0 %255
      %v258 = vsel %vm172, %v245, %v252
      %v259 = vsel %vm174, %v258, %v256
      %s260 = scalar_lea.vmem %s147, 144
      %v261 = vld [vmem:[%s260] sm:$0x1f]
      %s262 = scalar_lea.vmem %s147, 152
      %v263 = vld [vmem:[%s262] sm:$0x1f]
      %s264 = scalar_lea.vmem %s147, 160
      %v265 = vld [vmem:[%s264] sm:$0x1f]
      %267 = vrot.lane.b32.xlu0 %v263, 3
      %v268 = vpop.permute.xlu0 %267
      %271 = vrot.lane.b32.xlu0 %v265, 6
      %v272 = vpop.permute.xlu0 %271
      %v274 = vsel %vm172, %v261, %v268
      %v275 = vsel %vm174, %v274, %v272
      %s276 = scalar_lea.vmem %s147, 264
      %v277 = vld [vmem:[%s276] sm:$0x1f]
      %s278 = scalar_lea.vmem %s147, 272
      %v279 = vld [vmem:[%s278] sm:$0x1f]
      %s280 = scalar_lea.vmem %s147, 280
      %v281 = vld [vmem:[%s280] sm:$0x1f]
      %283 = vrot.lane.b32.xlu0 %v279, 3
      %v284 = vpop.permute.xlu0 %283
      %287 = vrot.lane.b32.xlu0 %v281, 6
      %v288 = vpop.permute.xlu0 %287
      %v290 = vsel %vm172, %v277, %v284
      %v291 = vsel %vm174, %v290, %v288
      %s292 = scalar_lea.vmem %s147, 384
      %v293 = vld [vmem:[%s292] sm:$0x1f]
      %s294 = scalar_lea.vmem %s147, 392
      %v295 = vld [vmem:[%s294] sm:$0x1f]
      %s296 = scalar_lea.vmem %s147, 400
      %v297 = vld [vmem:[%s296] sm:$0x1f]
      %299 = vrot.lane.b32.xlu0 %v295, 3
      %v300 = vpop.permute.xlu0 %299
      %303 = vrot.lane.b32.xlu0 %v297, 6
      %v304 = vpop.permute.xlu0 %303
      %v306 = vsel %vm172, %v293, %v300
      %v307 = vsel %vm174, %v306, %v304
      %309 = vrot.lane.b32.xlu0 %v275, 9
      %v310 = vpop.permute.xlu0 %309
      %313 = vrot.lane.b32.xlu0 %v291, 18
      %v314 = vpop.permute.xlu0 %313
      %317 = vrot.lane.b32.xlu0 %v307, 27
      %v318 = vpop.permute.xlu0 %317
      %v320 = vsel %vm236, %v259, %v310
      %v321 = vsel %vm238, %v320, %v314
      %v322 = vsel %vm240, %v321, %v318
      %323 = vst.msk [vmem:[%s157 + $0x5] sm:$0x1f] %vm242, %v322
      %s324 = scalar_lea.vmem %s147, 48
      %v325 = vld [vmem:[%s324] sm:$0x1f]
      %s326 = scalar_lea.vmem %s147, 56
      %v327 = vld [vmem:[%s326] sm:$0x1f]
      %s328 = scalar_lea.vmem %s147, 64
      %v329 = vld [vmem:[%s328] sm:$0x1f]
      %331 = vrot.lane.b32.xlu0 %v327, 3
      %v332 = vpop.permute.xlu0 %331
      %335 = vrot.lane.b32.xlu0 %v329, 6
      %v336 = vpop.permute.xlu0 %335
      %v338 = vsel %vm172, %v325, %v332
      %v339 = vsel %vm174, %v338, %v336
      %s340 = scalar_lea.vmem %s147, 168
      %v341 = vld [vmem:[%s340] sm:$0x1f]
      %s342 = scalar_lea.vmem %s147, 176
      %v343 = vld [vmem:[%s342] sm:$0x1f]
      %s344 = scalar_lea.vmem %s147, 184
      %v345 = vld [vmem:[%s344] sm:$0x1f]
      %347 = vrot.lane.b32.xlu0 %v343, 3
      %v348 = vpop.permute.xlu0 %347
      %351 = vrot.lane.b32.xlu0 %v345, 6
      %v352 = vpop.permute.xlu0 %351
      %v354 = vsel %vm172, %v341, %v348
      %v355 = vsel %vm174, %v354, %v352
      %s356 = scalar_lea.vmem %s147, 288
      %v357 = vld [vmem:[%s356] sm:$0x1f]
      %s358 = scalar_lea.vmem %s147, 296
      %v359 = vld [vmem:[%s358] sm:$0x1f]
      %s360 = scalar_lea.vmem %s147, 304
      %v361 = vld [vmem:[%s360] sm:$0x1f]
      %363 = vrot.lane.b32.xlu0 %v359, 3
      %v364 = vpop.permute.xlu0 %363
      %367 = vrot.lane.b32.xlu0 %v361, 6
      %v368 = vpop.permute.xlu0 %367
      %v370 = vsel %vm172, %v357, %v364
      %v371 = vsel %vm174, %v370, %v368
      %s372 = scalar_lea.vmem %s147, 408
      %v373 = vld [vmem:[%s372] sm:$0x1f]
      %s374 = scalar_lea.vmem %s147, 416
      %v375 = vld [vmem:[%s374] sm:$0x1f]
      %s376 = scalar_lea.vmem %s147, 424
      %v377 = vld [vmem:[%s376] sm:$0x1f]
      %379 = vrot.lane.b32.xlu0 %v375, 3
      %v380 = vpop.permute.xlu0 %379
      %383 = vrot.lane.b32.xlu0 %v377, 6
      %v384 = vpop.permute.xlu0 %383
      %v386 = vsel %vm172, %v373, %v380
      %v387 = vsel %vm174, %v386, %v384
      %389 = vrot.lane.b32.xlu0 %v355, 9
      %v390 = vpop.permute.xlu0 %389
      %393 = vrot.lane.b32.xlu0 %v371, 18
      %v394 = vpop.permute.xlu0 %393
      %397 = vrot.lane.b32.xlu0 %v387, 27
      %v398 = vpop.permute.xlu0 %397
      %v400 = vsel %vm236, %v339, %v390
      %v401 = vsel %vm238, %v400, %v394
      %v402 = vsel %vm240, %v401, %v398
      %403 = vst.msk [vmem:[%s157 + $0xa] sm:$0x1f] %vm242, %v402
      %s404 = scalar_lea.vmem %s147, 72
      %v405 = vld [vmem:[%s404] sm:$0x1f]
      %s406 = scalar_lea.vmem %s147, 80
      %v407 = vld [vmem:[%s406] sm:$0x1f]
      %s408 = scalar_lea.vmem %s147, 88
      %v409 = vld [vmem:[%s408] sm:$0x1f]
      %411 = vrot.lane.b32.xlu0 %v407, 3
      %v412 = vpop.permute.xlu0 %411
      %415 = vrot.lane.b32.xlu0 %v409, 6
      %v416 = vpop.permute.xlu0 %415
      %v418 = vsel %vm172, %v405, %v412
      %v419 = vsel %vm174, %v418, %v416
      %s420 = scalar_lea.vmem %s147, 192
      %v421 = vld [vmem:[%s420] sm:$0x1f]
      %s422 = scalar_lea.vmem %s147, 200
      %v423 = vld [vmem:[%s422] sm:$0x1f]
      %s424 = scalar_lea.vmem %s147, 208
      %v425 = vld [vmem:[%s424] sm:$0x1f]
      %427 = vrot.lane.b32.xlu0 %v423, 3
      %v428 = vpop.permute.xlu0 %427
      %431 = vrot.lane.b32.xlu0 %v425, 6
      %v432 = vpop.permute.xlu0 %431
      %v434 = vsel %vm172, %v421, %v428
      %v435 = vsel %vm174, %v434, %v432
      %s436 = scalar_lea.vmem %s147, 312
      %v437 = vld [vmem:[%s436] sm:$0x1f]
      %s438 = scalar_lea.vmem %s147, 320
      %v439 = vld [vmem:[%s438] sm:$0x1f]
      %s440 = scalar_lea.vmem %s147, 328
      %v441 = vld [vmem:[%s440] sm:$0x1f]
      %443 = vrot.lane.b32.xlu0 %v439, 3
      %v444 = vpop.permute.xlu0 %443
      %447 = vrot.lane.b32.xlu0 %v441, 6
      %v448 = vpop.permute.xlu0 %447
      %v450 = vsel %vm172, %v437, %v444
      %v451 = vsel %vm174, %v450, %v448
      %s452 = scalar_lea.vmem %s147, 432
      %v453 = vld [vmem:[%s452] sm:$0x1f]
      %s454 = scalar_lea.vmem %s147, 440
      %v455 = vld [vmem:[%s454] sm:$0x1f]
      %s456 = scalar_lea.vmem %s147, 448
      %v457 = vld [vmem:[%s456] sm:$0x1f]
      %459 = vrot.lane.b32.xlu0 %v455, 3
      %v460 = vpop.permute.xlu0 %459
      %463 = vrot.lane.b32.xlu0 %v457, 6
      %v464 = vpop.permute.xlu0 %463
      %v466 = vsel %vm172, %v453, %v460
      %v467 = vsel %vm174, %v466, %v464
      %469 = vrot.lane.b32.xlu0 %v435, 9
      %v470 = vpop.permute.xlu0 %469
      %473 = vrot.lane.b32.xlu0 %v451, 18
      %v474 = vpop.permute.xlu0 %473
      %477 = vrot.lane.b32.xlu0 %v467, 27
      %v478 = vpop.permute.xlu0 %477
      %v480 = vsel %vm236, %v419, %v470
      %v481 = vsel %vm238, %v480, %v474
      %v482 = vsel %vm240, %v481, %v478
      %483 = vst.msk [vmem:[%s157 + $0xf] sm:$0x1f] %vm242, %v482
      %s484 = scalar_lea.vmem %s147, 96
      %v485 = vld [vmem:[%s484] sm:$0x1f]
      %s486 = scalar_lea.vmem %s147, 104
      %v487 = vld [vmem:[%s486] sm:$0x1f]
      %s488 = scalar_lea.vmem %s147, 112
      %v489 = vld [vmem:[%s488] sm:$0x1f]
      %491 = vrot.lane.b32.xlu0 %v487, 3
      %v492 = vpop.permute.xlu0 %491
      %495 = vrot.lane.b32.xlu0 %v489, 6
      %v496 = vpop.permute.xlu0 %495
      %v498 = vsel %vm172, %v485, %v492
      %v499 = vsel %vm174, %v498, %v496
      %s500 = scalar_lea.vmem %s147, 216
      %v501 = vld [vmem:[%s500] sm:$0x1f]
      %s502 = scalar_lea.vmem %s147, 224
      %v503 = vld [vmem:[%s502] sm:$0x1f]
      %s504 = scalar_lea.vmem %s147, 232
      %v505 = vld [vmem:[%s504] sm:$0x1f]
      %507 = vrot.lane.b32.xlu0 %v503, 3
      %v508 = vpop.permute.xlu0 %507
      %511 = vrot.lane.b32.xlu0 %v505, 6
      %v512 = vpop.permute.xlu0 %511
      %v514 = vsel %vm172, %v501, %v508
      %v515 = vsel %vm174, %v514, %v512
      %s516 = scalar_lea.vmem %s147, 336
      %v517 = vld [vmem:[%s516] sm:$0x1f]
      %s518 = scalar_lea.vmem %s147, 344
      %v519 = vld [vmem:[%s518] sm:$0x1f]
      %s520 = scalar_lea.vmem %s147, 352
      %v521 = vld [vmem:[%s520] sm:$0x1f]
      %523 = vrot.lane.b32.xlu0 %v519, 3
      %v524 = vpop.permute.xlu0 %523
      %527 = vrot.lane.b32.xlu0 %v521, 6
      %v528 = vpop.permute.xlu0 %527
      %v530 = vsel %vm172, %v517, %v524
      %v531 = vsel %vm174, %v530, %v528
      %s532 = scalar_lea.vmem %s147, 456
      %v533 = vld [vmem:[%s532] sm:$0x1f]
      %s534 = scalar_lea.vmem %s147, 464
      %v535 = vld [vmem:[%s534] sm:$0x1f]
      %s536 = scalar_lea.vmem %s147, 472
      %v537 = vld [vmem:[%s536] sm:$0x1f]
      %539 = vrot.lane.b32.xlu0 %v535, 3
      %v540 = vpop.permute.xlu0 %539
      %543 = vrot.lane.b32.xlu0 %v537, 6
      %v544 = vpop.permute.xlu0 %543
      %v546 = vsel %vm172, %v533, %v540
      %v547 = vsel %vm174, %v546, %v544
      %549 = vrot.lane.b32.xlu0 %v515, 9
      %v550 = vpop.permute.xlu0 %549
      %553 = vrot.lane.b32.xlu0 %v531, 18
      %v554 = vpop.permute.xlu0 %553
      %557 = vrot.lane.b32.xlu0 %v547, 27
      %v558 = vpop.permute.xlu0 %557
      %v560 = vsel %vm236, %v499, %v550
      %v561 = vsel %vm238, %v560, %v554
      %v562 = vsel %vm240, %v561, %v558
      %563 = vst.msk [vmem:[%s157 + $0x14] sm:$0x1f] %vm242, %v562
      %s564 = smul.u32 4, %s17
      %p565 = scmp.lt.s32.totalorder %s16, 1
      %s566 = scalar_select %p565, %s16, 1
      %p567 = scmp.lt.s32.totalorder %s564, 3
      %s568 = scalar_select %p567, %s564, 3
      %s569 = smul.addr %s566, 4
      %s570 = sadd.s32 %s568, %s569
      %s571 = smul.addr %s570, 8
      %s572 = scalar_lea.vmem %s1, %s571
      // Predicated region
      $region25: #{tpu_custom_call.1} parent=23 // pred_check
        %p573 = pneg %p72
      $region26: #{tpu_custom_call.1} parent=23 // pred_check_branch
        %575 = sbr.rel (%p573) target = $region28
      $region27: #{tpu_custom_call.1} parent=23 // pred_region
        %s576 = smul.u32 4, %s17
      $region28: #{tpu_custom_call.1} parent=23 // pred_fallthru
        _
    $region24: #{tpu_custom_call.1} parent=5 // pred_fallthru
      _
    %p577 = scmp.le.s32.totalorder 2, %s7
    // Predicated region
    $region29: #{tpu_custom_call.1} parent=5 // pred_check
      %p578 = pneg %p577
    $region30: #{tpu_custom_call.1} parent=5 // pred_check_branch
      %580 = sbr.rel (%p578) target = $region32
    $region31: #{tpu_custom_call.1} parent=5 // pred_region
      %s581 = ssub.s32 %s7, 2
      // Predicated region
      $region33: #{tpu_custom_call.1} parent=31 // pred_check
        %p582 = pneg %p78
      $region34: #{tpu_custom_call.1} parent=31 // pred_check_branch
        %584 = sbr.rel (%p582) target = $region36
      $region35: #{tpu_custom_call.1} parent=31 // pred_region
        %s585 = smul.u32 4, %s19
        %p586 = scmp.lt.s32.totalorder %s18, 1
        %s587 = scalar_select %p586, %s18, 1
        %p588 = scmp.lt.s32.totalorder %s585, 3
        %s589 = scalar_select %p588, %s585, 3
        %s590 = smul.addr %s587, 4
        %s591 = sadd.s32 %s589, %s590
        %s592 = smul.addr %s591, 8
        %s593 = scalar_lea.vmem %s1, %s592
      $region36: #{tpu_custom_call.1} parent=31 // pred_fallthru
        _
    $region32: #{tpu_custom_call.1} parent=5 // pred_fallthru
      _
  $region6: #{tpu_custom_call.1} parent=0 // loop_footer
    %s11 = sadd.s32 1, %s7
  $region7: #{tpu_custom_call.1} parent=0 // loop_footer_branch
    %6 = sbr.rel target = $region3
  $region8: #{tpu_custom_call.1} parent=0 // loop_exit
    _

</llo_original>
